<compile_context>
chip_gen: v6e
topology: v6e:2x2x1
jax: 0.10.0
libtpu: 0.0.40
codegen_flags: <defaults>
</compile_context>

<pallas_src>
import functools

import jax
import jax.numpy as jnp
from jax import lax
from jax.experimental import pallas as pl
from jax.experimental.pallas import tpu as pltpu


def _round_up(v: int, m: int) -> int:
    return ((v + m - 1) // m) * m


def _dwconv_kernel(x_ref, w_ref, b_ref, o_ref, halo_ref, *, K, B, S_pad):
    """One (Rt, Ft) row x feature tile of the flattened (L*B, F) activation.

    x_ref   : (Rt, Ft)   activations; rows = flattened (L, B)
    w_ref   : (K, Ft)    float32 taps (resident across the grid)
    b_ref   : (1, Ft)    float32 bias (resident)
    o_ref   : (Rt, Ft)
    halo_ref: (S_pad, Ft) scratch; last S_pad rows of the previous row tile
              (the causal look-back window), kept in the input dtype.
    """
    r = pl.program_id(1)
    Rt = x_ref.shape[0]

    x_raw = x_ref[...]
    xf = x_raw.astype(jnp.float32)
    w = w_ref[...]            # (K, Ft) f32 (pre-cast in wrapper)
    b = b_ref[...]            # (1, Ft) f32

    if K == 1:                # degenerate: pointwise scale + bias
        o_ref[...] = (xf * w[0:1] + b).astype(o_ref.dtype)
        return

    # ---- halo: causal look-back window carried across row tiles ------------
    @pl.when(r == 0)
    def _init_halo():
        # First row tile of each feature tile: look-back is the zero padding.
        halo_ref[...] = jnp.zeros_like(halo_ref)

    halo = halo_ref[...].astype(jnp.float32)          # (S_pad, Ft)

    # ---- bulk rows [S_pad, Rt): every tap comes from this tile -------------
    # pltpu.roll(x, s, 0)[i] == x[i - s] for i >= s (XLU slot, no staging
    # store / misaligned reloads); the wrapped head rows are overwritten below.
    if Rt > S_pad:
        acc = xf * w[K - 1:K] + b                     # zero-shift tap + bias
        for j in range(K - 1):
            s = (K - 1 - j) * B                       # static row shift
            acc = acc + pltpu.roll(xf, shift=s, axis=0) * w[j:j + 1]
        o_ref[S_pad:, :] = acc[S_pad:].astype(o_ref.dtype)

    # ---- head rows [0, S_pad): splice the carried halo into the look-back --
    x_head = xf[0:S_pad]                              # aligned (S_pad, Ft) slice
    row_ids = lax.broadcasted_iota(jnp.int32, (S_pad, 1), 0)
    head = x_head * w[K - 1:K] + b
    for j in range(K - 1):
        s = (K - 1 - j) * B                           # 0 < s <= S_pad
        s_mod = s % S_pad
        tap = jnp.where(row_ids < s,
                        pltpu.roll(halo, shift=s_mod, axis=0),
                        pltpu.roll(x_head, shift=s_mod, axis=0))
        head = head + tap * w[j:j + 1]
    o_ref[0:S_pad, :] = head.astype(o_ref.dtype)

    # ---- carry: last S_pad rows of this tile feed the next row tile --------
    @pl.when(r + 1 < pl.num_programs(1))
    def _save_carry():
        halo_ref[...] = x_raw[Rt - S_pad:]            # aligned, from registers


def _default_config():
    """Tile sizes / VMEM budget for the current TPU generation."""
    vmem_cap = 64 * 1024 * 1024                       # conservative (v7x / core)
    try:
        info = pltpu.get_tpu_info()
        vmem_cap = int(getattr(info, "vmem_capacity_bytes", vmem_cap) or vmem_cap)
    except Exception:
        pass
    vmem_limit = max(32 * 1024 * 1024, (vmem_cap * 3) // 4)
    if vmem_cap >= 100 * 1024 * 1024:                 # v5e / v6e (128 MiB VMEM)
        return 4096, 512, vmem_limit
    return 2048, 512, vmem_limit                      # v7x (64 MiB per core)


def _choose_f_tile(F_pad: int, f_tile: int) -> int:
    """Lane tile: multiple of 128, exact divisor of F_pad, >=2 tiles if possible."""
    cap = max(128, min((f_tile // 128) * 128, F_pad))
    if F_pad >= 256:
        # Keep at least two feature tiles so the "parallel" axis can be split
        # across both TensorCores on v7x (row axis carries state -> not splittable).
        cap = min(cap, max(128, (F_pad // 2 // 128) * 128))
    best_div = None
    ft = cap
    while ft >= 128:
        if F_pad % ft == 0:
            if (F_pad // ft) % 2 == 0:                # prefer an even tile count
                return ft
            if best_div is None:
                best_div = ft
        ft -= 128
    return best_div if best_div is not None else cap


def _choose_r_tile(R_pad: int, r_tile: int, s_pad: int) -> int:
    """Row tile: multiple of 8, >= halo, prefer an exact divisor of R_pad."""
    want = max(min(_round_up(r_tile, 8), R_pad), s_pad)
    floor = max(s_pad, max(8, want // 2))
    rt = want
    while rt >= floor:
        if R_pad % rt == 0:
            return rt
        rt -= 8
    return want


def dwise_conv_primer_ez(x, weight, bias, kernel_size: int = 3, *,
                         r_tile=None, f_tile=None):
    """Causal depthwise conv along the sequence axis (Primer-EZ forward).

    x      : (L, B, F)            Length x Batch x Features
    weight : (F, 1, K) or (F, K)  PyTorch nn.Conv1d(F, F, K, groups=F) weight
    bias   : (F,)
    """
    L, B, F = x.shape
    K = int(kernel_size)
    assert weight.size == F * K, "weight must hold (F, 1, K) depthwise taps"

    def_r, def_f, vmem_limit = _default_config()
    r_tile = def_r if r_tile is None else r_tile
    f_tile = def_f if f_tile is None else f_tile

    # (F,1,K) -> (K, F) f32 taps; w2d[j, c] = weight[c, 0, j].  Bias -> (1, F) f32.
    w2d = jnp.transpose(weight.reshape(F, K)).astype(jnp.float32)
    b2d = bias.reshape(1, F).astype(jnp.float32)

    R = L * B                                  # flattened rows
    S = (K - 1) * B                            # causal look-back rows
    S_pad = _round_up(S, 8) if S > 0 else 8    # halo scratch rows (>= 8)

    # Lane-pad F to a multiple of 128 (unmasked stores) and row-pad R to a
    # multiple of 8 (and at least the halo).  Padded rows/channels are zeros;
    # they sit after all real rows so they never feed a real output.
    F_pad = _round_up(F, 128)
    R_pad = max(_round_up(R, 8), S_pad if K > 1 else 8)

    x2 = x.reshape(R, F)
    if (R_pad, F_pad) != (R, F):
        x2 = jnp.pad(x2, ((0, R_pad - R), (0, F_pad - F)))
    if F_pad != F:
        w2d = jnp.pad(w2d, ((0, 0), (0, F_pad - F)))
        b2d = jnp.pad(b2d, ((0, 0), (0, F_pad - F)))

    Ft = _choose_f_tile(F_pad, f_tile)
    Rt = _choose_r_tile(R_pad, r_tile, S_pad if K > 1 else 8)

    nf = pl.cdiv(F_pad, Ft)
    nr = pl.cdiv(R_pad, Rt)

    kernel = functools.partial(_dwconv_kernel, K=K, B=B, S_pad=S_pad)

    itemsize = jnp.dtype(x.dtype).itemsize
    cost = pl.CostEstimate(
        flops=2 * K * R_pad * F_pad,
        transcendentals=0,
        bytes_accessed=2 * R_pad * F_pad * itemsize + (K + 1) * F_pad * 4,
    )

    out2 = pl.pallas_call(
        kernel,
        out_shape=jax.ShapeDtypeStruct((R_pad, F_pad), x.dtype),
        grid=(nf, nr),                                     # rows innermost (carry)
        in_specs=[
            pl.BlockSpec((Rt, Ft), lambda f, r: (r, f)),   # activations
            pl.BlockSpec((K, Ft), lambda f, r: (0, f)),    # taps (resident)
            pl.BlockSpec((1, Ft), lambda f, r: (0, f)),    # bias (resident)
        ],
        out_specs=pl.BlockSpec((Rt, Ft), lambda f, r: (r, f)),
        scratch_shapes=[pltpu.VMEM((S_pad, Ft), x.dtype)],
        compiler_params=pltpu.CompilerParams(
            dimension_semantics=("parallel", "arbitrary"),
            vmem_limit_bytes=vmem_limit,
        ),
        cost_estimate=cost,
    )(x2, w2d, b2d)

    if (R_pad, F_pad) != (R, F):
        out2 = out2[:R, :F]
    return out2.reshape(L, B, F)


def _reference(x, weight, bias, kernel_size: int = 3):
    # Pure-JAX reference of the PyTorch forward (same math, no Pallas).
    L, _, F = x.shape
    K = kernel_size
    w = weight.reshape(F, K)
    xp = jnp.pad(x, ((K - 1, 0), (0, 0), (0, 0)))
    out = sum(w[:, j][None, None, :] * xp[j:j + L] for j in range(K))
    return out + bias[None, None, :]


if __name__ == "__main__":
    K = 3
    keys = jax.random.split(jax.random.PRNGKey(0), 9)

    # --- Test 1: module-sized small shapes (d_model=32 -> F=96, lane-padded to 128)
    d_model = 32
    F = 3 * d_model
    L, B = 8, 2
    x = jax.random.normal(keys[0], (L, B, F), dtype=jnp.float32)
    w = 0.1 * jax.random.normal(keys[1], (F, 1, K), dtype=jnp.float32)   # PyTorch layout
    b = 0.1 * jax.random.normal(keys[2], (F,), dtype=jnp.float32)
    out = jax.block_until_ready(dwise_conv_primer_ez(x, w, b, kernel_size=K))
    ref = _reference(x, w, b, kernel_size=K)
    assert out.shape == (L, B, F)
    assert jnp.allclose(out, ref, atol=1e-5, rtol=1e-5), "mismatch vs reference (test 1)"

    # --- Test 2: multiple row tiles (halo carry) + multiple feature tiles
    L2, B2, F2 = 48, 4, 256
    x2 = jax.random.normal(keys[3], (L2, B2, F2), dtype=jnp.float32)
    w2 = 0.1 * jax.random.normal(keys[4], (F2, 1, K), dtype=jnp.float32)
    b2 = 0.1 * jax.random.normal(keys[5], (F2,), dtype=jnp.float32)
    out2 = jax.block_until_ready(
        dwise_conv_primer_ez(x2, w2, b2, kernel_size=K, r_tile=64, f_tile=128))
    ref2 = _reference(x2, w2, b2, kernel_size=K)
    assert jnp.allclose(out2, ref2, atol=1e-5, rtol=1e-5), "mismatch vs reference (test 2)"

    # --- Test 3: rows not a multiple of 8 (wrapper row padding) + odd batch
    L3, B3, F3 = 10, 3, 96
    x3 = jax.random.normal(keys[6], (L3, B3, F3), dtype=jnp.float32)
    w3 = 0.1 * jax.random.normal(keys[7], (F3, 1, K), dtype=jnp.float32)
    b3 = 0.1 * jax.random.normal(keys[8], (F3,), dtype=jnp.float32)
    out3 = jax.block_until_ready(
        dwise_conv_primer_ez(x3, w3, b3, kernel_size=K, r_tile=16))
    ref3 = _reference(x3, w3, b3, kernel_size=K)
    assert jnp.allclose(out3, ref3, atol=1e-5, rtol=1e-5), "mismatch vs reference (test 3)"

    # --- Test 4: row tile equal to the halo (head-only path, carry every step)
    out4 = jax.block_until_ready(
        dwise_conv_primer_ez(x, w, b, kernel_size=K, r_tile=8, f_tile=128))
    assert jnp.allclose(out4, ref, atol=1e-5, rtol=1e-5), "mismatch vs reference (test 4)"

    print("KERNEL_OK")
</pallas_src>

<mosaic_0001>
module attributes {stable_mosaic.version = 11 : i64} {
  func.func @_dwconv_kernel(%arg0: i32, %arg1: i32, %arg2: memref<16x128xf32, #tpu.memory_space<vmem>>, %arg3: memref<3x128xf32, #tpu.memory_space<vmem>>, %arg4: memref<1x128xf32, #tpu.memory_space<vmem>>, %arg5: memref<16x128xf32, #tpu.memory_space<vmem>>, %arg6: memref<8x128xf32, #tpu.memory_space<vmem>>) attributes {dimension_semantics = [#tpu.dimension_semantics<parallel>, #tpu.dimension_semantics<arbitrary>], iteration_bounds = array<i64: 1, 1>, scalar_prefetch = 0 : i64, scratch_operands = 1 : i64, tpu.core_type = #tpu.core_type<tc>, window_params = [{transform_indices = @transform_0, window_bounds = array<i64: 16, 128>}, {transform_indices = @transform_1, window_bounds = array<i64: 3, 128>}, {transform_indices = @transform_2, window_bounds = array<i64: 1, 128>}, {transform_indices = @transform_3, window_bounds = array<i64: 16, 128>}]} {
    %c0 = arith.constant 0 : index
    %c0_0 = arith.constant 0 : index
    %0 = vector.load %arg2[%c0, %c0_0] : memref<16x128xf32, #tpu.memory_space<vmem>>, vector<16x128xf32>
    %c0_1 = arith.constant 0 : index
    %c0_2 = arith.constant 0 : index
    %1 = vector.load %arg3[%c0_1, %c0_2] : memref<3x128xf32, #tpu.memory_space<vmem>>, vector<3x128xf32>
    %c0_3 = arith.constant 0 : index
    %c0_4 = arith.constant 0 : index
    %2 = vector.load %arg4[%c0_3, %c0_4] : memref<1x128xf32, #tpu.memory_space<vmem>>, vector<1x128xf32>
    %c0_i32 = arith.constant 0 : i32
    %3 = arith.cmpi eq, %arg1, %c0_i32 : i32
    %4 = arith.extui %3 : i1 to i32
    %c0_i32_5 = arith.constant 0 : i32
    %5 = arith.cmpi ne, %4, %c0_i32_5 : i32
    scf.if %5 {
      %cst = arith.constant 0.000000e+00 : f32
      %58 = vector.broadcast %cst : f32 to vector<8x128xf32>
      %c0_19 = arith.constant 0 : index
      %c0_20 = arith.constant 0 : index
      %59 = vector.load %arg6[%c0_19, %c0_20] : memref<8x128xf32, #tpu.memory_space<vmem>>, vector<8x128xf32>
      tpu.vector_store %arg6[%c0_19, %c0_20], %58 {strides = array<i32>} : memref<8x128xf32, #tpu.memory_space<vmem>>, vector<8x128xf32>,
    } else {
    }
    %c0_6 = arith.constant 0 : index
    %c0_7 = arith.constant 0 : index
    %6 = vector.load %arg6[%c0_6, %c0_7] : memref<8x128xf32, #tpu.memory_space<vmem>>, vector<8x128xf32>
    %7 = vector.extract_strided_slice %1 {offsets = [2, 0], sizes = [1, 128], strides = [1, 1]} : vector<3x128xf32> to vector<1x128xf32>
    %8 = vector.broadcast %7 : vector<1x128xf32> to vector<16x128xf32>
    %9 = arith.mulf %0, %8 : vector<16x128xf32>
    %10 = vector.broadcast %2 : vector<1x128xf32> to vector<16x128xf32>
    %11 = arith.addf %9, %10 : vector<16x128xf32>
    %c4_i32 = arith.constant 4 : i32
    %12 = tpu.dynamic_rotate %0 by %c4_i32 dim 0 : vector<16x128xf32>, i32 -> vector<16x128xf32>
    %13 = vector.extract_strided_slice %1 {offsets = [0, 0], sizes = [1, 128], strides = [1, 1]} : vector<3x128xf32> to vector<1x128xf32>
    %14 = vector.broadcast %13 : vector<1x128xf32> to vector<16x128xf32>
    %15 = arith.mulf %12, %14 : vector<16x128xf32>
    %16 = arith.addf %11, %15 : vector<16x128xf32>
    %c2_i32 = arith.constant 2 : i32
    %17 = tpu.dynamic_rotate %0 by %c2_i32 dim 0 : vector<16x128xf32>, i32 -> vector<16x128xf32>
    %18 = vector.extract_strided_slice %1 {offsets = [1, 0], sizes = [1, 128], strides = [1, 1]} : vector<3x128xf32> to vector<1x128xf32>
    %19 = vector.broadcast %18 : vector<1x128xf32> to vector<16x128xf32>
    %20 = arith.mulf %17, %19 : vector<16x128xf32>
    %21 = arith.addf %16, %20 : vector<16x128xf32>
    %22 = vector.extract_strided_slice %21 {offsets = [8, 0], sizes = [8, 128], strides = [1, 1]} : vector<16x128xf32> to vector<8x128xf32>
    %c8 = arith.constant 8 : index
    %c0_8 = arith.constant 0 : index
    %23 = vector.load %arg5[%c8, %c0_8] : memref<16x128xf32, #tpu.memory_space<vmem>>, vector<8x128xf32>
    tpu.vector_store %arg5[%c8, %c0_8], %22 {strides = array<i32>} : memref<16x128xf32, #tpu.memory_space<vmem>>, vector<8x128xf32>,
    %24 = vector.extract_strided_slice %0 {offsets = [0, 0], sizes = [8, 128], strides = [1, 1]} : vector<16x128xf32> to vector<8x128xf32>
    %25 = tpu.iota {dimensions = array<i32: 0>} : vector<8x1xi32>
    %26 = vector.extract_strided_slice %1 {offsets = [2, 0], sizes = [1, 128], strides = [1, 1]} : vector<3x128xf32> to vector<1x128xf32>
    %27 = vector.broadcast %26 : vector<1x128xf32> to vector<8x128xf32>
    %28 = arith.mulf %24, %27 : vector<8x128xf32>
    %29 = vector.broadcast %2 : vector<1x128xf32> to vector<8x128xf32>
    %30 = arith.addf %28, %29 : vector<8x128xf32>
    %c4_i32_9 = arith.constant 4 : i32
    %31 = vector.broadcast %c4_i32_9 : i32 to vector<8x1xi32>
    %32 = arith.cmpi slt, %25, %31 : vector<8x1xi32>
    %c4_i32_10 = arith.constant 4 : i32
    %33 = tpu.dynamic_rotate %6 by %c4_i32_10 dim 0 : vector<8x128xf32>, i32 -> vector<8x128xf32>
    %c4_i32_11 = arith.constant 4 : i32
    %34 = tpu.dynamic_rotate %24 by %c4_i32_11 dim 0 : vector<8x128xf32>, i32 -> vector<8x128xf32>
    %35 = vector.shape_cast %32 : vector<8x1xi1> to vector<8x1xi1>
    %36 = vector.broadcast %35 : vector<8x1xi1> to vector<8x128xi1>
    %37 = arith.select %36, %33, %34 : vector<8x128xi1>, vector<8x128xf32>
    %38 = vector.extract_strided_slice %1 {offsets = [0, 0], sizes = [1, 128], strides = [1, 1]} : vector<3x128xf32> to vector<1x128xf32>
    %39 = vector.broadcast %38 : vector<1x128xf32> to vector<8x128xf32>
    %40 = arith.mulf %37, %39 : vector<8x128xf32>
    %41 = arith.addf %30, %40 : vector<8x128xf32>
    %c2_i32_12 = arith.constant 2 : i32
    %42 = vector.broadcast %c2_i32_12 : i32 to vector<8x1xi32>
    %43 = arith.cmpi slt, %25, %42 : vector<8x1xi32>
    %c2_i32_13 = arith.constant 2 : i32
    %44 = tpu.dynamic_rotate %6 by %c2_i32_13 dim 0 : vector<8x128xf32>, i32 -> vector<8x128xf32>
    %c2_i32_14 = arith.constant 2 : i32
    %45 = tpu.dynamic_rotate %24 by %c2_i32_14 dim 0 : vector<8x128xf32>, i32 -> vector<8x128xf32>
    %46 = vector.shape_cast %43 : vector<8x1xi1> to vector<8x1xi1>
    %47 = vector.broadcast %46 : vector<8x1xi1> to vector<8x128xi1>
    %48 = arith.select %47, %44, %45 : vector<8x128xi1>, vector<8x128xf32>
    %49 = vector.extract_strided_slice %1 {offsets = [1, 0], sizes = [1, 128], strides = [1, 1]} : vector<3x128xf32> to vector<1x128xf32>
    %50 = vector.broadcast %49 : vector<1x128xf32> to vector<8x128xf32>
    %51 = arith.mulf %48, %50 : vector<8x128xf32>
    %52 = arith.addf %41, %51 : vector<8x128xf32>
    %c0_15 = arith.constant 0 : index
    %c0_16 = arith.constant 0 : index
    %53 = vector.load %arg5[%c0_15, %c0_16] : memref<16x128xf32, #tpu.memory_space<vmem>>, vector<8x128xf32>
    tpu.vector_store %arg5[%c0_15, %c0_16], %52 {strides = array<i32>} : memref<16x128xf32, #tpu.memory_space<vmem>>, vector<8x128xf32>,
    %c1_i32 = arith.constant 1 : i32
    %54 = arith.addi %arg1, %c1_i32 : i32
    %c1_i32_17 = arith.constant 1 : i32
    %55 = arith.cmpi slt, %54, %c1_i32_17 : i32
    %56 = arith.extui %55 : i1 to i32
    %c0_i32_18 = arith.constant 0 : i32
    %57 = arith.cmpi ne, %56, %c0_i32_18 : i32
    scf.if %57 {
      %58 = vector.extract_strided_slice %0 {offsets = [8, 0], sizes = [8, 128], strides = [1, 1]} : vector<16x128xf32> to vector<8x128xf32>
      %c0_19 = arith.constant 0 : index
      %c0_20 = arith.constant 0 : index
      %59 = vector.load %arg6[%c0_19, %c0_20] : memref<8x128xf32, #tpu.memory_space<vmem>>, vector<8x128xf32>
      tpu.vector_store %arg6[%c0_19, %c0_20], %58 {strides = array<i32>} : memref<8x128xf32, #tpu.memory_space<vmem>>, vector<8x128xf32>,
    } else {
    }
    return
  }
  func.func @transform_0(%arg0: i32, %arg1: i32) -> (i32, i32) {
    %c0_i32 = arith.constant 0 : i32
    return %arg1, %arg0 : i32, i32
  }
  func.func @transform_1(%arg0: i32, %arg1: i32) -> (i32, i32) {
    %c0_i32 = arith.constant 0 : i32
    %c0_i32_0 = arith.constant 0 : i32
    return %c0_i32, %arg0 : i32, i32
  }
  func.func @transform_2(%arg0: i32, %arg1: i32) -> (i32, i32) {
    %c0_i32 = arith.constant 0 : i32
    %c0_i32_0 = arith.constant 0 : i32
    return %c0_i32, %arg0 : i32, i32
  }
  func.func @transform_3(%arg0: i32, %arg1: i32) -> (i32, i32) {
    %c0_i32 = arith.constant 0 : i32
    return %arg1, %arg0 : i32, i32
  }
}

</mosaic_0001>

<llo_original>
// kernel: tpu_custom_call.1
$region0: #{tpu_custom_call.1}
  #allocation0 [shape = 'u32[]', space=smem, size = 0x4, offset = 0x4, fixed_abs, tag = 'smem constant byte address 0x4 - core index']
  #allocation1 [shape = 'u32[144,128]{1,0:T(1,128)}', space=vmem, size = 0x12000, scoped, tag = 'internal scratch']
  #allocation2 [shape = 'f32[8,128]{1,0:T(8,128)}', space=vmem, size = 0x1000, scoped, tag = 'scratch operand']
  %s0 = inlined_call_operand.hbm [shape: f32[16,128], index: 0, kind: input, shape index: {}]
  %s1 = inlined_call_operand.hbm [shape: f32[3,128], index: 1, kind: input, shape index: {}]
  %s2 = inlined_call_operand.vmem [shape: f32[1,128], index: 2, kind: input, shape index: {}]
  %s3 = inlined_call_operand.hbm [shape: f32[16,128], index: 3, kind: output, shape index: {}]
  %s4 = sld [smem:[#allocation0]]
  $region38: #{tpu_custom_call.1} parent=0
    _
  %s6 = ssub.s32 1, %s4
  %s7 = scalar_select 0, %s6, %s4
  $region1: #{tpu_custom_call.1} parent=0
    #allocation3 [shape = 'u8[8192]{0}', space=vmem, size = 0x2000, scoped, tag = 'input window, operand 0, single buffered']
    #allocation4 [shape = 's32[1]{0}', space=sflag, size = 0x4, scoped, tag = 'scoped memory for tpu_custom_call.1']
    #allocation5 [shape = 's32[1]{0}', space=sflag, size = 0x4, scoped, tag = 'scoped memory for tpu_custom_call.1']
    #allocation6 [shape = 'u8[2048]{0}', space=vmem, size = 0x800, scoped, tag = 'input window, operand 1, single buffered']
    #allocation7 [shape = 's32[1]{0}', space=sflag, size = 0x4, scoped, tag = 'scoped memory for tpu_custom_call.1']
    #allocation8 [shape = 'u8[8192]{0}', space=vmem, size = 0x2000, scoped, tag = 'output window, operand 0, single buffered']
    %8 = vsyncpa [#allocation4], 0
    %9 = vsyncpa [#allocation7], 0
    %10 = vsyncpa [#allocation5], 0
    // Predicated region
    $region2: #{tpu_custom_call.1} parent=1 // pred_check
      _
    $region3: #{tpu_custom_call.1} parent=1 // pred_check_branch
      %12 = sbr.rel (0) target = $region5
    $region4: #{tpu_custom_call.1} parent=1 // pred_region
      %s14 = ssub.s32 256, 256
      %15 = vsyncadd [#allocation4], %s14
      %s16 = sshll.u32 [#allocation3], 4
      %s17 = int_to_ptr.vmem [resolvable:$true] %s16
      %22 = dma.hbm_to_vmem [thread:$0]  %s0, 256, %s17, [#allocation4], 128, 128, 8
    $region5: #{tpu_custom_call.1} parent=1 // pred_fallthru
      _
    // Predicated region
    $region6: #{tpu_custom_call.1} parent=1 // pred_check
      _
    $region7: #{tpu_custom_call.1} parent=1 // pred_check_branch
      %24 = sbr.rel (0) target = $region9
    $region8: #{tpu_custom_call.1} parent=1 // pred_region
      %s26 = ssub.s32 64, 64
      %27 = vsyncadd [#allocation7], %s26
      %s29 = sshll.u32 [#allocation6], 4
      %s30 = int_to_ptr.vmem [resolvable:$true] %s29
      %32 = dma.hbm_to_vmem [thread:$0]  %s1, 64, %s30, [#allocation7]
    $region9: #{tpu_custom_call.1} parent=1 // pred_fallthru
      _
    // Predicated region
    $region10: #{tpu_custom_call.1} parent=1 // pred_check
      _
    $region11: #{tpu_custom_call.1} parent=1 // pred_check_branch
      %34 = sbr.rel (0) target = $region13
    $region12: #{tpu_custom_call.1} parent=1 // pred_region
      _
    $region13: #{tpu_custom_call.1} parent=1 // pred_fallthru
      _
    // Predicated region
    $region14: #{tpu_custom_call.1} parent=1 // pred_check
      _
    $region15: #{tpu_custom_call.1} parent=1 // pred_check_branch
      %36 = sbr.rel (0) target = $region17
    $region16: #{tpu_custom_call.1} parent=1 // pred_region
      %37 = dma.done [#allocation4], 256
    $region17: #{tpu_custom_call.1} parent=1 // pred_fallthru
      _
    // Predicated region
    $region18: #{tpu_custom_call.1} parent=1 // pred_check
      _
    $region19: #{tpu_custom_call.1} parent=1 // pred_check_branch
      %39 = sbr.rel (0) target = $region21
    $region20: #{tpu_custom_call.1} parent=1 // pred_region
      %40 = dma.done [#allocation7], 64
    $region21: #{tpu_custom_call.1} parent=1 // pred_fallthru
      _
    %v41 = vld [vmem:[#allocation3] sm:$0xff]
    %v42 = vld [vmem:[#allocation3 + $0x8] sm:$0xff]
    %v43 = vld [vmem:[#allocation6] sm:$0x7]
    %v44 = vld [vmem:[%s2] sm:$0x1]
    %p45 = scmp.eq.s32.totalorder 0, 0
    // Predicated region
    $region22: #{tpu_custom_call.1} parent=1 // pred_check
      %p46 = pneg %p45
    $region23: #{tpu_custom_call.1} parent=1 // pred_check_branch
      %48 = sbr.rel (%p46) target = $region25
    $region24: #{tpu_custom_call.1} parent=1 // pred_region
      %49 = vst [vmem:[#allocation2] sm:$0xff] 0.0
    $region25: #{tpu_custom_call.1} parent=1 // pred_fallthru
      _
    %v50 = vld [vmem:[#allocation2] sm:$0xff]
    %v51 = vlaneseq
    %v52 = vshrl.u32 %v51, 7
    %v53 = vsub.s32 2, %v52
    %v54 = vrot.slane %v43, %v53
    %v55 = vmul.f32 %v42, %v54
    %v57 = vlaneseq
    %v58 = vshrl.u32 %v57, 7
    %v59 = vsub.s32 0, %v58
    %v60 = vrot.slane %v44, %v59
    %v62 = vadd.f32 %v55, %v60
    %v63 = vrot.slane %v41, 4
    %v64 = vrot.slane %v42, 4
    %v65 = vlaneseq
    %v66 = vshrl.u32 %v65, 7
    %vm67 = vcmp.lt.s32.totalorder %v66, 4
    %v68 = vsel %vm67, %v63, %v64
    %v69 = vlaneseq
    %v70 = vshrl.u32 %v69, 7
    %v71 = vsub.s32 0, %v70
    %v72 = vrot.slane %v43, %v71
    %v73 = vmul.f32 %v68, %v72
    %v74 = vadd.f32 %v62, %v73
    %v75 = vrot.slane %v41, 6
    %v76 = vrot.slane %v42, 6
    %vm77 = vcmp.lt.s32.totalorder %v66, 2
    %v78 = vsel %vm77, %v75, %v76
    %v79 = vlaneseq
    %v80 = vshrl.u32 %v79, 7
    %v81 = vsub.s32 1, %v80
    %v82 = vrot.slane %v43, %v81
    %v83 = vmul.f32 %v78, %v82
    %v84 = vadd.f32 %v74, %v83
    %85 = vst [vmem:[#allocation8 + $0x8] sm:$0xff] %v84
    %v86 = vmul.f32 %v41, %v54
    %v87 = vadd.f32 %v86, %v60
    %v88 = vrot.slane %v50, 4
    %v89 = vsel %vm67, 1, 0
    %vm90 = vcmp.eq.s32.totalorder %v89, 1
    %v91 = vsel %vm90, %v88, %v63
    %v92 = vmul.f32 %v91, %v72
    %v93 = vadd.f32 %v87, %v92
    %v94 = vrot.slane %v50, 6
    %v95 = vsel %vm77, 1, 0
    %vm96 = vcmp.eq.s32.totalorder %v95, 1
    %v97 = vsel %vm96, %v94, %v75
    %v98 = vmul.f32 %v97, %v82
    %v99 = vadd.f32 %v93, %v98
    %100 = vst [vmem:[#allocation8] sm:$0xff] %v99
    %s101 = sadd.s32 0, 1
    %p102 = scmp.lt.s32.totalorder %s101, 1
    // Predicated region
    $region26: #{tpu_custom_call.1} parent=1 // pred_check
      %p103 = pneg %p102
    $region27: #{tpu_custom_call.1} parent=1 // pred_check_branch
      %105 = sbr.rel (%p103) target = $region29
    $region28: #{tpu_custom_call.1} parent=1 // pred_region
      %106 = vst [vmem:[#allocation2] sm:$0xff] %v42
    $region29: #{tpu_custom_call.1} parent=1 // pred_fallthru
      _
    // Predicated region
    $region30: #{tpu_custom_call.1} parent=1 // pred_check
      _
    $region31: #{tpu_custom_call.1} parent=1 // pred_check_branch
      %108 = sbr.rel (0) target = $region33
    $region32: #{tpu_custom_call.1} parent=1 // pred_region
      %s110 = ssub.s32 256, 256
      %111 = vsyncadd [#allocation5], %s110
      %s112 = sshll.u32 [#allocation8], 4
      %s113 = int_to_ptr.vmem [resolvable:$true] %s112
      %118 = dma.vmem_to_hbm [thread:$0]  %s113, 256, %s3, [#allocation5], 128, 128, 8
    $region33: #{tpu_custom_call.1} parent=1 // pred_fallthru
      _
    // Predicated region
    $region34: #{tpu_custom_call.1} parent=1 // pred_check
      _
    $region35: #{tpu_custom_call.1} parent=1 // pred_check_branch
      %120 = sbr.rel (0) target = $region37
    $region36: #{tpu_custom_call.1} parent=1 // pred_region
      %121 = dma.done [#allocation5], 256
    $region37: #{tpu_custom_call.1} parent=1 // pred_fallthru
      _
    %122 = vsyncpa [#allocation4], 1
    %123 = vsyncpa [#allocation7], 1
    %124 = vsyncpa [#allocation5], 1

</llo_original>
